<compile_context>
chip_gen: v7x
topology: tpu7x:2x2x1
jax: 0.10.0
libtpu: 0.0.40
codegen_flags: <defaults>
</compile_context>

<pallas_src>
import functools

import jax
import jax.numpy as jnp
from jax.experimental import pallas as pl
from jax.experimental.pallas import tpu as pltpu

LANE = 128          # vreg lane width
ROW_PACK = 16       # bf16 packs 16 rows per vreg -> round batch tiles to 16
DEFAULT_TB = 2048   # batch tile (sweep {1024, 2048, 4096} for huge batches)
SMALL_BATCH = 256   # below this, plain XLA beats pallas_call fixed overhead


def _round_up(x: int, m: int) -> int:
    return ((x + m - 1) // m) * m


def actor_mlp_kernel(x_ref, w1_ref, b1_ref, w2_ref, b2_ref, w3_ref, b3_ref, out_ref):
    """Fused 3-layer MLP + tanh head: bf16 MXU operands, f32 accumulation,
    f32 bias/ReLU/tanh, f32 compact output."""
    x = x_ref[...].astype(w1_ref.dtype)                        # f32 -> bf16 in VMEM
    h1 = jnp.dot(x, w1_ref[...], preferred_element_type=jnp.float32)
    h1 = jnp.maximum(h1 + b1_ref[...], 0.0)
    h2 = jnp.dot(h1.astype(w2_ref.dtype), w2_ref[...],
                 preferred_element_type=jnp.float32)
    h2 = jnp.maximum(h2 + b2_ref[...], 0.0)
    h3 = jnp.dot(h2.astype(w3_ref.dtype), w3_ref[...],
                 preferred_element_type=jnp.float32)
    out_ref[...] = jnp.tanh(h3 + b3_ref[...]).astype(out_ref.dtype)


def prepare_actor_params(params):
    """One-time prep: pad the hidden dim to a multiple of 128 lanes and cast the
    weights to bf16.  Zero padding keeps the math exact (padded weight rows/cols
    and padded bias entries are zero).  Call once, reuse for every forward."""
    w1, b1 = params["w1"], params["b1"]
    w2, b2 = params["w2"], params["b2"]
    w3, b3 = params["w3"], params["b3"]
    state_dim, hidden_dim = w1.shape
    action_dim = w3.shape[1]
    hp = _round_up(hidden_dim, LANE)
    cdt = jnp.bfloat16

    w1p = jnp.zeros((state_dim, hp), cdt).at[:, :hidden_dim].set(w1.astype(cdt))
    w2p = jnp.zeros((hp, hp), cdt).at[:hidden_dim, :hidden_dim].set(w2.astype(cdt))
    w3p = jnp.zeros((hp, action_dim), cdt).at[:hidden_dim, :].set(w3.astype(cdt))
    b1p = jnp.zeros((1, hp), jnp.float32).at[:, :hidden_dim].set(b1)
    b2p = jnp.zeros((1, hp), jnp.float32).at[:, :hidden_dim].set(b2)
    b3p = b3.astype(jnp.float32).reshape(1, action_dim)

    return {
        "kernel": (w1p, b1p, w2p, b2p, w3p, b3p),
        "raw": {"w1": w1, "b1": b1, "w2": w2, "b2": b2, "w3": w3, "b3": b3},
    }


def _vmem_limit_bytes(TB, state_dim, hp, action_dim):
    """Size the scoped-VMEM request from the actual tiles (+margin), instead of
    hard-coding 64 MiB (which is the entire physical VMEM of a v7x TC)."""
    x_tile = TB * state_dim * 4                     # f32 input tile
    out_tile = TB * action_dim * 4                  # f32 compact output tile
    weights = (state_dim * hp + hp * hp + hp * action_dim) * 2   # bf16
    biases = (2 * hp + action_dim) * 4
    inter = 2 * TB * hp * 4                         # h1 / h2 f32 intermediates
    est = 2 * (x_tile + out_tile + weights + biases) + inter     # x2: double buffers
    return int(min(est + (16 << 20), 48 << 20))


@functools.partial(jax.jit, static_argnames=("tile_b",))
def _actor_forward_pallas(x, kernel_params, *, tile_b: int = DEFAULT_TB):
    w1p, b1p, w2p, b2p, w3p, b3p = kernel_params
    B, state_dim = x.shape
    hp = w1p.shape[1]
    action_dim = w3p.shape[1]

    # Batch tile: large for throughput, rounded to 16 rows (bf16 sublane pack),
    # shrunk to the (rounded) batch when B is small.
    TB = min(_round_up(tile_b, ROW_PACK), _round_up(B, ROW_PACK))
    Bp = _round_up(B, TB)
    xp = x if Bp == B else jnp.zeros((Bp, state_dim), x.dtype).at[:B].set(x)

    grid = (Bp // TB,)

    def const(shape):
        # Constant index map -> operand stays VMEM-resident across all tiles.
        # (pipeline_mode=pl.Buffered(1) would drop the redundant second buffer;
        #  skipped: the weights here are only tens of KiB.)
        return pl.BlockSpec(shape, lambda i: (0, 0))

    out = pl.pallas_call(
        actor_mlp_kernel,
        out_shape=jax.ShapeDtypeStruct((Bp, action_dim), jnp.float32),
        grid=grid,
        in_specs=[
            # Raw f32 x streamed per batch tile; last dim == full array dim.
            pl.BlockSpec((TB, state_dim), lambda i: (i, 0)),
            const((state_dim, hp)), const((1, hp)),
            const((hp, hp)), const((1, hp)),
            const((hp, action_dim)), const((1, action_dim)),
        ],
        # Compact output: last dim == full array dim (action_dim), no lane padding.
        out_specs=pl.BlockSpec((TB, action_dim), lambda i: (i, 0)),
        compiler_params=pltpu.CompilerParams(
            dimension_semantics=("parallel",),
            vmem_limit_bytes=_vmem_limit_bytes(TB, state_dim, hp, action_dim),
        ),
    )(xp, w1p, b1p, w2p, b2p, w3p, b3p)

    # Only the padded batch rows (garbage tanh(b3)) are dropped; no column slice.
    return out if Bp == B else out[:B]


@jax.jit
def _actor_forward_xla(x, raw):
    h = jnp.maximum(x @ raw["w1"] + raw["b1"], 0.0)
    h = jnp.maximum(h @ raw["w2"] + raw["b2"], 0.0)
    return jnp.tanh(h @ raw["w3"] + raw["b3"])


def actor_forward(x, prepared, *, tile_b: int = DEFAULT_TB, force_pallas: bool = False):
    """Actor forward pass.  Tiny batches use plain XLA (pallas_call overhead
    dominates); larger batches use the fused Pallas kernel."""
    if not force_pallas and x.shape[0] < SMALL_BATCH:
        return _actor_forward_xla(x, prepared["raw"])
    return _actor_forward_pallas(x, prepared["kernel"], tile_b=tile_b)


def init_actor_params(key, state_dim, action_dim, hidden_dim):
    """Deterministic init mirroring nn.Linear (weights stored transposed: (in, out))."""
    ks = jax.random.split(key, 6)

    def linear(kw, kb, fan_in, fan_out):
        bound = 1.0 / jnp.sqrt(fan_in)
        w = jax.random.uniform(kw, (fan_in, fan_out), jnp.float32, -bound, bound)
        b = jax.random.uniform(kb, (1, fan_out), jnp.float32, -bound, bound)
        return w, b

    w1, b1 = linear(ks[0], ks[1], state_dim, hidden_dim)
    w2, b2 = linear(ks[2], ks[3], hidden_dim, hidden_dim)
    w3, b3 = linear(ks[4], ks[5], hidden_dim, action_dim)
    return {"w1": w1, "b1": b1, "w2": w2, "b2": b2, "w3": w3, "b3": b3}


if __name__ == "__main__":
    state_dim, action_dim, hidden_dim = 16, 4, 32
    batch = 8

    key = jax.random.PRNGKey(0)
    k_params, k_x = jax.random.split(key)
    params = init_actor_params(k_params, state_dim, action_dim, hidden_dim)
    prepared = prepare_actor_params(params)

    def reference(xx):
        h = jnp.maximum(xx @ params["w1"] + params["b1"], 0.0)
        h = jnp.maximum(h @ params["w2"] + params["b2"], 0.0)
        return jnp.tanh(h @ params["w3"] + params["b3"])

    # 1) Small batch, Pallas path forced so the kernel itself is exercised.
    x = jax.random.normal(k_x, (batch, state_dim), jnp.float32)
    out = jax.block_until_ready(actor_forward(x, prepared, force_pallas=True))
    assert out.shape == (batch, action_dim)
    # Loose tolerance vs f32 reference: kernel uses bf16 MXU operands / f32 acc.
    assert jnp.allclose(out, reference(x), atol=3e-2, rtol=3e-2), \
        float(jnp.abs(out - reference(x)).max())

    # 2) Multi-tile grid + ragged batch (exercises batch padding and row slice).
    x2 = jax.random.normal(jax.random.PRNGKey(1), (40, state_dim), jnp.float32)
    out2 = jax.block_until_ready(
        actor_forward(x2, prepared, tile_b=16, force_pallas=True))
    assert out2.shape == (40, action_dim)
    assert jnp.allclose(out2, reference(x2), atol=3e-2, rtol=3e-2), \
        float(jnp.abs(out2 - reference(x2)).max())

    print("KERNEL_OK")
</pallas_src>

<mosaic_0001>
module attributes {stable_mosaic.version = 11 : i64} {
  func.func @actor_mlp_kernel(%arg0: i32, %arg1: memref<16x16xf32, #tpu.memory_space<vmem>>, %arg2: memref<16x128xbf16, #tpu.memory_space<vmem>>, %arg3: memref<1x128xf32, #tpu.memory_space<vmem>>, %arg4: memref<128x128xbf16, #tpu.memory_space<vmem>>, %arg5: memref<1x128xf32, #tpu.memory_space<vmem>>, %arg6: memref<128x4xbf16, #tpu.memory_space<vmem>>, %arg7: memref<1x4xf32, #tpu.memory_space<vmem>>, %arg8: memref<16x4xf32, #tpu.memory_space<vmem>>) attributes {dimension_semantics = [#tpu.dimension_semantics<parallel>], iteration_bounds = array<i64: 1>, scalar_prefetch = 0 : i64, scratch_operands = 0 : i64, tpu.core_type = #tpu.core_type<tc>, window_params = [{transform_indices = @transform_0, window_bounds = array<i64: 16, 16>}, {pipeline_mode = #tpu.pipeline_mode<synchronous>, transform_indices = @transform_1, window_bounds = array<i64: 16, 128>}, {pipeline_mode = #tpu.pipeline_mode<synchronous>, transform_indices = @transform_2, window_bounds = array<i64: 1, 128>}, {pipeline_mode = #tpu.pipeline_mode<synchronous>, transform_indices = @transform_3, window_bounds = array<i64: 128, 128>}, {pipeline_mode = #tpu.pipeline_mode<synchronous>, transform_indices = @transform_4, window_bounds = array<i64: 1, 128>}, {pipeline_mode = #tpu.pipeline_mode<synchronous>, transform_indices = @transform_5, window_bounds = array<i64: 128, 4>}, {pipeline_mode = #tpu.pipeline_mode<synchronous>, transform_indices = @transform_6, window_bounds = array<i64: 1, 4>}, {transform_indices = @transform_7, window_bounds = array<i64: 16, 4>}]} {
    %c0 = arith.constant 0 : index
    %c0_0 = arith.constant 0 : index
    %0 = vector.load %arg1[%c0, %c0_0] : memref<16x16xf32, #tpu.memory_space<vmem>>, vector<16x16xf32>
    %1 = arith.truncf %0 : vector<16x16xf32> to vector<16x16xbf16>
    %c0_1 = arith.constant 0 : index
    %c0_2 = arith.constant 0 : index
    %2 = vector.load %arg2[%c0_1, %c0_2] : memref<16x128xbf16, #tpu.memory_space<vmem>>, vector<16x128xbf16>
    %cst = arith.constant dense<0.000000e+00> : vector<16x128xf32>
    %3 = tpu.matmul %1, %2, %cst {dimension_numbers = #tpu.dot_dimension_numbers<[1], [0], [0], [1], [0, 0, 1, 1], [], []>} : vector<16x16xbf16>, vector<16x128xbf16>, vector<16x128xf32> -> vector<16x128xf32>
    %c0_3 = arith.constant 0 : index
    %c0_4 = arith.constant 0 : index
    %4 = vector.load %arg3[%c0_3, %c0_4] : memref<1x128xf32, #tpu.memory_space<vmem>>, vector<1x128xf32>
    %5 = vector.broadcast %4 : vector<1x128xf32> to vector<16x128xf32>
    %6 = arith.addf %3, %5 : vector<16x128xf32>
    %cst_5 = arith.constant 0.000000e+00 : f32
    %7 = vector.broadcast %cst_5 : f32 to vector<16x128xf32>
    %8 = arith.maximumf %6, %7 : vector<16x128xf32>
    %9 = arith.truncf %8 : vector<16x128xf32> to vector<16x128xbf16>
    %c0_6 = arith.constant 0 : index
    %c0_7 = arith.constant 0 : index
    %10 = vector.load %arg4[%c0_6, %c0_7] : memref<128x128xbf16, #tpu.memory_space<vmem>>, vector<128x128xbf16>
    %cst_8 = arith.constant dense<0.000000e+00> : vector<16x128xf32>
    %11 = tpu.matmul %9, %10, %cst_8 {dimension_numbers = #tpu.dot_dimension_numbers<[1], [0], [0], [1], [0, 0, 1, 1], [], []>} : vector<16x128xbf16>, vector<128x128xbf16>, vector<16x128xf32> -> vector<16x128xf32>
    %c0_9 = arith.constant 0 : index
    %c0_10 = arith.constant 0 : index
    %12 = vector.load %arg5[%c0_9, %c0_10] : memref<1x128xf32, #tpu.memory_space<vmem>>, vector<1x128xf32>
    %13 = vector.broadcast %12 : vector<1x128xf32> to vector<16x128xf32>
    %14 = arith.addf %11, %13 : vector<16x128xf32>
    %cst_11 = arith.constant 0.000000e+00 : f32
    %15 = vector.broadcast %cst_11 : f32 to vector<16x128xf32>
    %16 = arith.maximumf %14, %15 : vector<16x128xf32>
    %17 = arith.truncf %16 : vector<16x128xf32> to vector<16x128xbf16>
    %c0_12 = arith.constant 0 : index
    %c0_13 = arith.constant 0 : index
    %18 = vector.load %arg6[%c0_12, %c0_13] : memref<128x4xbf16, #tpu.memory_space<vmem>>, vector<128x4xbf16>
    %cst_14 = arith.constant dense<0.000000e+00> : vector<16x4xf32>
    %19 = tpu.matmul %17, %18, %cst_14 {dimension_numbers = #tpu.dot_dimension_numbers<[1], [0], [0], [1], [0, 0, 1, 1], [], []>} : vector<16x128xbf16>, vector<128x4xbf16>, vector<16x4xf32> -> vector<16x4xf32>
    %c0_15 = arith.constant 0 : index
    %c0_16 = arith.constant 0 : index
    %20 = vector.load %arg7[%c0_15, %c0_16] : memref<1x4xf32, #tpu.memory_space<vmem>>, vector<1x4xf32>
    %21 = vector.broadcast %20 : vector<1x4xf32> to vector<16x4xf32>
    %22 = arith.addf %19, %21 : vector<16x4xf32>
    %23 = math.tanh %22 : vector<16x4xf32>
    %c0_17 = arith.constant 0 : index
    %c0_18 = arith.constant 0 : index
    %24 = vector.load %arg8[%c0_17, %c0_18] : memref<16x4xf32, #tpu.memory_space<vmem>>, vector<16x4xf32>
    tpu.vector_store %arg8[%c0_17, %c0_18], %23 {strides = array<i32>} : memref<16x4xf32, #tpu.memory_space<vmem>>, vector<16x4xf32>,
    return
  }
  func.func @transform_0(%arg0: i32) -> (i32, i32) {
    %c0_i32 = arith.constant 0 : i32
    %c0_i32_0 = arith.constant 0 : i32
    return %arg0, %c0_i32 : i32, i32
  }
  func.func @transform_1(%arg0: i32) -> (i32, i32) {
    %c0_i32 = arith.constant 0 : i32
    %c0_i32_0 = arith.constant 0 : i32
    %c0_i32_1 = arith.constant 0 : i32
    return %c0_i32, %c0_i32_0 : i32, i32
  }
  func.func @transform_2(%arg0: i32) -> (i32, i32) {
    %c0_i32 = arith.constant 0 : i32
    %c0_i32_0 = arith.constant 0 : i32
    %c0_i32_1 = arith.constant 0 : i32
    return %c0_i32, %c0_i32_0 : i32, i32
  }
  func.func @transform_3(%arg0: i32) -> (i32, i32) {
    %c0_i32 = arith.constant 0 : i32
    %c0_i32_0 = arith.constant 0 : i32
    %c0_i32_1 = arith.constant 0 : i32
    return %c0_i32, %c0_i32_0 : i32, i32
  }
  func.func @transform_4(%arg0: i32) -> (i32, i32) {
    %c0_i32 = arith.constant 0 : i32
    %c0_i32_0 = arith.constant 0 : i32
    %c0_i32_1 = arith.constant 0 : i32
    return %c0_i32, %c0_i32_0 : i32, i32
  }
  func.func @transform_5(%arg0: i32) -> (i32, i32) {
    %c0_i32 = arith.constant 0 : i32
    %c0_i32_0 = arith.constant 0 : i32
    %c0_i32_1 = arith.constant 0 : i32
    return %c0_i32, %c0_i32_0 : i32, i32
  }
  func.func @transform_6(%arg0: i32) -> (i32, i32) {
    %c0_i32 = arith.constant 0 : i32
    %c0_i32_0 = arith.constant 0 : i32
    %c0_i32_1 = arith.constant 0 : i32
    return %c0_i32, %c0_i32_0 : i32, i32
  }
  func.func @transform_7(%arg0: i32) -> (i32, i32) {
    %c0_i32 = arith.constant 0 : i32
    %c0_i32_0 = arith.constant 0 : i32
    return %arg0, %c0_i32 : i32, i32
  }
}

</mosaic_0001>

<llo_original>
// kernel: _actor_forward_pallas.1
$region0: #{_actor_forward_pallas.1}
  #allocation0 [shape = 'u32[]', space=smem, size = 0x4, offset = 0x4, fixed_abs, tag = 'smem constant byte address 0x4 - core index']
  #allocation1 [shape = 'u32[144,128]{1,0:T(1,128)}', space=vmem, size = 0x12000, scoped, tag = 'internal scratch']
  %s0 = inlined_call_operand.vmem [shape: f32[16,16], index: 0, kind: input, shape index: {}]
  %s1 = inlined_call_operand.vmem [shape: bf16[16,128], index: 1, kind: input, shape index: {}]
  %s2 = inlined_call_operand.vmem [shape: f32[1,128], index: 2, kind: input, shape index: {}]
  %s3 = inlined_call_operand.vmem [shape: bf16[128,128], index: 3, kind: input, shape index: {}]
  %s4 = inlined_call_operand.vmem [shape: f32[1,128], index: 4, kind: input, shape index: {}]
  %s5 = inlined_call_operand.vmem [shape: bf16[128,4], index: 5, kind: input, shape index: {}]
  %s6 = inlined_call_operand.vmem [shape: f32[1,4], index: 6, kind: input, shape index: {}]
  %s7 = inlined_call_operand.vmem [shape: f32[16,4], index: 7, kind: output, shape index: {}]
  %s8 = sld [smem:[#allocation0]]
  $region38: #{_actor_forward_pallas.1} parent=0
    _
  %s10 = ssub.s32 1, %s8
  %s11 = scalar_select 0, %s10, %s8
  // Predicated region
  $region2: #{_actor_forward_pallas.1} parent=0 // pred_check
    _
  $region3: #{_actor_forward_pallas.1} parent=0 // pred_check_branch
    %13 = sbr.rel (0) target = $region5
  $region4: #{_actor_forward_pallas.1} parent=0 // pred_region
    _
  $region5: #{_actor_forward_pallas.1} parent=0 // pred_fallthru
    _
  // Predicated region
  $region6: #{_actor_forward_pallas.1} parent=0 // pred_check
    _
  $region7: #{_actor_forward_pallas.1} parent=0 // pred_check_branch
    %15 = sbr.rel (0) target = $region9
  $region8: #{_actor_forward_pallas.1} parent=0 // pred_region
    _
  $region9: #{_actor_forward_pallas.1} parent=0 // pred_fallthru
    _
  // Predicated region
  $region10: #{_actor_forward_pallas.1} parent=0 // pred_check
    _
  $region11: #{_actor_forward_pallas.1} parent=0 // pred_check_branch
    %17 = sbr.rel (0) target = $region13
  $region12: #{_actor_forward_pallas.1} parent=0 // pred_region
    _
  $region13: #{_actor_forward_pallas.1} parent=0 // pred_fallthru
    _
  // Predicated region
  $region14: #{_actor_forward_pallas.1} parent=0 // pred_check
    _
  $region15: #{_actor_forward_pallas.1} parent=0 // pred_check_branch
    %19 = sbr.rel (0) target = $region17
  $region16: #{_actor_forward_pallas.1} parent=0 // pred_region
    _
  $region17: #{_actor_forward_pallas.1} parent=0 // pred_fallthru
    _
  // Predicated region
  $region18: #{_actor_forward_pallas.1} parent=0 // pred_check
    _
  $region19: #{_actor_forward_pallas.1} parent=0 // pred_check_branch
    %21 = sbr.rel (0) target = $region21
  $region20: #{_actor_forward_pallas.1} parent=0 // pred_region
    _
  $region21: #{_actor_forward_pallas.1} parent=0 // pred_fallthru
    _
  // Predicated region
  $region22: #{_actor_forward_pallas.1} parent=0 // pred_check
    _
  $region23: #{_actor_forward_pallas.1} parent=0 // pred_check_branch
    %23 = sbr.rel (0) target = $region25
  $region24: #{_actor_forward_pallas.1} parent=0 // pred_region
    _
  $region25: #{_actor_forward_pallas.1} parent=0 // pred_fallthru
    _
  // Predicated region
  $region26: #{_actor_forward_pallas.1} parent=0 // pred_check
    _
  $region27: #{_actor_forward_pallas.1} parent=0 // pred_check_branch
    %25 = sbr.rel (0) target = $region29
  $region28: #{_actor_forward_pallas.1} parent=0 // pred_region
    _
  $region29: #{_actor_forward_pallas.1} parent=0 // pred_fallthru
    _
  %v27 = vld [vmem:[%s0] sm:$0xff]
  %v28 = vld [vmem:[%s0 + $0x8] sm:$0xff]
  %v29 = vpack.c.bf16 %v28, %v27
  %v30 = vld [vmem:[%s1] sm:$0xf]
  %v31 = vld [vmem:[%s1 + $0x4] sm:$0xf]
  %v32 = vld [vmem:[%s2] sm:$0x1]
  %v34 = vlaneseq
  %v35 = vshrl.u32 %v34, 7
  %v36 = vsub.s32 0, %v35
  %v37 = vrot.slane %v32, %v36
  %v41 = vunpack.c.l.b16 %v30
  %v42 = vunpack.c.l.b16 %v31
  %v43 = vpack.c.b16 %v42, %v41
  %vm45 = vcmask 130048
  %v47 = vsel %vm45, %v29, 0
  %49 = vmatprep.subr.bf16.mxu0 0
  %50 = vmatpush1.bf16.msra.mxu0 %v43
  %51 = vmatprep.subr.bf16.mxu0 0
  %52 = vmatpush1.bf16.msra.mxu0 0
  %53 = vmatprep.subr.bf16.mxu0 0
  %54 = vmatpush1.bf16.msra.mxu0 0
  %55 = vmatprep.subr.bf16.mxu0 0
  %56 = vmatpush1.bf16.msra.mxu0 0
  %57 = vmatprep.subr.bf16.mxu0 0
  %58 = vmatpush1.bf16.msra.mxu0 0
  %59 = vmatprep.subr.bf16.mxu0 0
  %60 = vmatpush1.bf16.msra.mxu0 0
  %61 = vmatprep.subr.bf16.mxu0 0
  %62 = vmatpush1.bf16.msra.mxu0 0
  %63 = vmatprep.subr.bf16.mxu0 0
  %64 = vmatpush1.bf16.msra.mxu0 0
  %65 = vmatprep.subr.bf16.mxu0 0
  %66 = vmatpush1.bf16.msra.mxu0 0
  %67 = vmatprep.subr.bf16.mxu0 0
  %68 = vmatpush1.bf16.msra.mxu0 0
  %69 = vmatprep.subr.bf16.mxu0 0
  %70 = vmatpush1.bf16.msra.mxu0 0
  %71 = vmatprep.subr.bf16.mxu0 0
  %72 = vmatpush1.bf16.msra.mxu0 0
  %73 = vmatprep.subr.bf16.mxu0 0
  %74 = vmatpush1.bf16.msra.mxu0 0
  %75 = vmatprep.subr.bf16.mxu0 0
  %76 = vmatpush1.bf16.msra.mxu0 0
  %77 = vmatprep.subr.bf16.mxu0 0
  %78 = vmatpush1.bf16.msra.mxu0 0
  %79 = vmatprep.subr.bf16.mxu0 0
  %80 = vmatpush1.bf16.msra.mxu0 0
  %81 = vmatprep.mubr.bf16.mxu0 0
  %82 = vmatmul.mubr.bf16.gmra.mrb[0].mxu0 %v47
  %v83 = vpop.f32.mrb[0].mxu0
  %v84 = vadd.f32 %v37, %v83
  %v85 = vpop.f32.mrb[0].mxu0
  %v86 = vpop.f32.mrb[0].mxu0
  %v87 = vadd.f32 %v37, %v86
  %v88 = vpop.f32.mrb[0].mxu0
  %89 = vdwg.mxu0
  %v90 = vmax.f32 %v84, 0.0
  %v91 = vmax.f32 %v87, 0.0
  %v92 = vpack.c.bf16 %v91, %v90
  %v93 = vld [vmem:[%s3] sm:$0xf]
  %v94 = vld [vmem:[%s3 + $0x4] sm:$0xf]
  %v95 = vld [vmem:[%s3 + $0x8] sm:$0xf]
  %v96 = vld [vmem:[%s3 + $0xc] sm:$0xf]
  %v97 = vld [vmem:[%s3 + $0x10] sm:$0xf]
  %v98 = vld [vmem:[%s3 + $0x14] sm:$0xf]
  %v99 = vld [vmem:[%s3 + $0x18] sm:$0xf]
  %v100 = vld [vmem:[%s3 + $0x1c] sm:$0xf]
  %v101 = vld [vmem:[%s3 + $0x20] sm:$0xf]
  %v102 = vld [vmem:[%s3 + $0x24] sm:$0xf]
  %v103 = vld [vmem:[%s3 + $0x28] sm:$0xf]
  %v104 = vld [vmem:[%s3 + $0x2c] sm:$0xf]
  %v105 = vld [vmem:[%s3 + $0x30] sm:$0xf]
  %v106 = vld [vmem:[%s3 + $0x34] sm:$0xf]
  %v107 = vld [vmem:[%s3 + $0x38] sm:$0xf]
  %v108 = vld [vmem:[%s3 + $0x3c] sm:$0xf]
  %v109 = vld [vmem:[%s4] sm:$0x1]
  %v111 = vlaneseq
  %v112 = vshrl.u32 %v111, 7
  %v113 = vsub.s32 0, %v112
  %v114 = vrot.slane %v109, %v113
  %v132 = vunpack.c.l.b16 %v93
  %v133 = vunpack.c.l.b16 %v94
  %v134 = vunpack.c.l.b16 %v95
  %v135 = vunpack.c.l.b16 %v96
  %v136 = vunpack.c.l.b16 %v97
  %v137 = vunpack.c.l.b16 %v98
  %v138 = vunpack.c.l.b16 %v99
  %v139 = vunpack.c.l.b16 %v100
  %v140 = vunpack.c.l.b16 %v101
  %v141 = vunpack.c.l.b16 %v102
  %v142 = vunpack.c.l.b16 %v103
  %v143 = vunpack.c.l.b16 %v104
  %v144 = vunpack.c.l.b16 %v105
  %v145 = vunpack.c.l.b16 %v106
  %v146 = vunpack.c.l.b16 %v107
  %v147 = vunpack.c.l.b16 %v108
  %v148 = vpack.c.b16 %v133, %v132
  %v149 = vpack.c.b16 %v135, %v134
  %v150 = vpack.c.b16 %v137, %v136
  %v151 = vpack.c.b16 %v139, %v138
  %v152 = vpack.c.b16 %v141, %v140
  %v153 = vpack.c.b16 %v143, %v142
  %v154 = vpack.c.b16 %v145, %v144
  %v155 = vpack.c.b16 %v147, %v146
  %164 = vmatprep.subr.bf16.mxu0 0
  %165 = vmatpush1.bf16.msra.mxu0 %v148
  %166 = vmatprep.subr.bf16.mxu0 0
  %167 = vmatpush1.bf16.msra.mxu0 %v149
  %168 = vmatprep.subr.bf16.mxu0 0
  %169 = vmatpush1.bf16.msra.mxu0 %v150
  %170 = vmatprep.subr.bf16.mxu0 0
  %171 = vmatpush1.bf16.msra.mxu0 %v151
  %172 = vmatprep.subr.bf16.mxu0 0
  %173 = vmatpush1.bf16.msra.mxu0 %v152
  %174 = vmatprep.subr.bf16.mxu0 0
  %175 = vmatpush1.bf16.msra.mxu0 %v153
  %176 = vmatprep.subr.bf16.mxu0 0
  %177 = vmatpush1.bf16.msra.mxu0 %v154
  %178 = vmatprep.subr.bf16.mxu0 0
  %179 = vmatpush1.bf16.msra.mxu0 %v155
  %180 = vmatprep.subr.bf16.mxu0 0
  %181 = vmatpush1.bf16.msra.mxu0 0
  %182 = vmatprep.subr.bf16.mxu0 0
  %183 = vmatpush1.bf16.msra.mxu0 0
  %184 = vmatprep.subr.bf16.mxu0 0
  %185 = vmatpush1.bf16.msra.mxu0 0
  %186 = vmatprep.subr.bf16.mxu0 0
  %187 = vmatpush1.bf16.msra.mxu0 0
  %188 = vmatprep.subr.bf16.mxu0 0
  %189 = vmatpush1.bf16.msra.mxu0 0
  %190 = vmatprep.subr.bf16.mxu0 0
  %191 = vmatpush1.bf16.msra.mxu0 0
  %192 = vmatprep.subr.bf16.mxu0 0
  %193 = vmatpush1.bf16.msra.mxu0 0
  %194 = vmatprep.subr.bf16.mxu0 0
  %195 = vmatpush1.bf16.msra.mxu0 0
  %196 = vmatprep.mubr.bf16.mxu0 0
  %197 = vmatmul.mubr.bf16.gmra.mrb[0].mxu0 %v92
  %v198 = vpop.f32.mrb[0].mxu0
  %v199 = vadd.f32 %v114, %v198
  %v200 = vpop.f32.mrb[0].mxu0
  %v201 = vpop.f32.mrb[0].mxu0
  %v202 = vadd.f32 %v114, %v201
  %v203 = vpop.f32.mrb[0].mxu0
  %204 = vdwg.mxu0
  %v205 = vmax.f32 %v199, 0.0
  %v206 = vmax.f32 %v202, 0.0
  %v207 = vpack.c.bf16 %v206, %v205
  %v208 = vld [vmem:[%s5] sm:$0xf]
  %v209 = vld [vmem:[%s5 + $0x4] sm:$0xf]
  %v210 = vld [vmem:[%s5 + $0x8] sm:$0xf]
  %v211 = vld [vmem:[%s5 + $0xc] sm:$0xf]
  %v212 = vld [vmem:[%s5 + $0x10] sm:$0xf]
  %v213 = vld [vmem:[%s5 + $0x14] sm:$0xf]
  %v214 = vld [vmem:[%s5 + $0x18] sm:$0xf]
  %v215 = vld [vmem:[%s5 + $0x1c] sm:$0xf]
  %v216 = vld [vmem:[%s5 + $0x20] sm:$0xf]
  %v217 = vld [vmem:[%s5 + $0x24] sm:$0xf]
  %v218 = vld [vmem:[%s5 + $0x28] sm:$0xf]
  %v219 = vld [vmem:[%s5 + $0x2c] sm:$0xf]
  %v220 = vld [vmem:[%s5 + $0x30] sm:$0xf]
  %v221 = vld [vmem:[%s5 + $0x34] sm:$0xf]
  %v222 = vld [vmem:[%s5 + $0x38] sm:$0xf]
  %v223 = vld [vmem:[%s5 + $0x3c] sm:$0xf]
  %v224 = vld [vmem:[%s6] sm:$0x1]
  %v226 = vlaneseq
  %v227 = vshrl.u32 %v226, 7
  %v228 = vsub.s32 0, %v227
  %v229 = vrot.slane %v224, %v228
  %v247 = vunpack.c.l.b16 %v208
  %v248 = vunpack.c.l.b16 %v209
  %v249 = vunpack.c.l.b16 %v210
  %v250 = vunpack.c.l.b16 %v211
  %v251 = vunpack.c.l.b16 %v212
  %v252 = vunpack.c.l.b16 %v213
  %v253 = vunpack.c.l.b16 %v214
  %v254 = vunpack.c.l.b16 %v215
  %v255 = vunpack.c.l.b16 %v216
  %v256 = vunpack.c.l.b16 %v217
  %v257 = vunpack.c.l.b16 %v218
  %v258 = vunpack.c.l.b16 %v219
  %v259 = vunpack.c.l.b16 %v220
  %v260 = vunpack.c.l.b16 %v221
  %v261 = vunpack.c.l.b16 %v222
  %v262 = vunpack.c.l.b16 %v223
  %v263 = vpack.c.b16 %v248, %v247
  %v264 = vpack.c.b16 %v250, %v249
  %v265 = vpack.c.b16 %v252, %v251
  %v266 = vpack.c.b16 %v254, %v253
  %v267 = vpack.c.b16 %v256, %v255
  %v268 = vpack.c.b16 %v258, %v257
  %v269 = vpack.c.b16 %v260, %v259
  %v270 = vpack.c.b16 %v262, %v261
  %279 = vmatprep.subr.bf16.mxu0 0
  %280 = vmatpush1.bf16.msra.mxu0 %v263
  %281 = vmatprep.subr.bf16.mxu0 0
  %282 = vmatpush1.bf16.msra.mxu0 %v264
  %283 = vmatprep.subr.bf16.mxu0 0
  %284 = vmatpush1.bf16.msra.mxu0 %v265
  %285 = vmatprep.subr.bf16.mxu0 0
  %286 = vmatpush1.bf16.msra.mxu0 %v266
  %287 = vmatprep.subr.bf16.mxu0 0
  %288 = vmatpush1.bf16.msra.mxu0 %v267
  %289 = vmatprep.subr.bf16.mxu0 0
  %290 = vmatpush1.bf16.msra.mxu0 %v268
  %291 = vmatprep.subr.bf16.mxu0 0
  %292 = vmatpush1.bf16.msra.mxu0 %v269
  %293 = vmatprep.subr.bf16.mxu0 0
  %294 = vmatpush1.bf16.msra.mxu0 %v270
  %295 = vmatprep.subr.bf16.mxu0 0
  %296 = vmatpush1.bf16.msra.mxu0 0
  %297 = vmatprep.subr.bf16.mxu0 0
  %298 = vmatpush1.bf16.msra.mxu0 0
  %299 = vmatprep.subr.bf16.mxu0 0
  %300 = vmatpush1.bf16.msra.mxu0 0
  %301 = vmatprep.subr.bf16.mxu0 0
  %302 = vmatpush1.bf16.msra.mxu0 0
  %303 = vmatprep.subr.bf16.mxu0 0
  %304 = vmatpush1.bf16.msra.mxu0 0
  %305 = vmatprep.subr.bf16.mxu0 0
  %306 = vmatpush1.bf16.msra.mxu0 0
  %307 = vmatprep.subr.bf16.mxu0 0
  %308 = vmatpush1.bf16.msra.mxu0 0
  %309 = vmatprep.subr.bf16.mxu0 0
  %310 = vmatpush1.bf16.msra.mxu0 0
  %311 = vmatprep.mubr.bf16.mxu0 0
  %312 = vmatmul.mubr.bf16.gmra.mrb[0].mxu0 %v207
  %v313 = vpop.f32.mrb[0].mxu0
  %v314 = vadd.f32 %v229, %v313
  %v315 = vpop.f32.mrb[0].mxu0
  %v316 = vpop.f32.mrb[0].mxu0
  %v317 = vadd.f32 %v229, %v316
  %v318 = vpop.f32.mrb[0].mxu0
  %319 = vdwg.mxu0
  %v320 = vtanh.pop %v314
  %v321 = vtanh.pop %v317
  %vm322 = vcmask 31744
  %323 = vst.msk [vmem:[%s7] sm:$0xff] %vm322, %v320
  %324 = vst.msk [vmem:[%s7 + $0x8] sm:$0xff] %vm322, %v321
  // Predicated region
  $region30: #{_actor_forward_pallas.1} parent=0 // pred_check
    _
  $region31: #{_actor_forward_pallas.1} parent=0 // pred_check_branch
    %326 = sbr.rel (0) target = $region33
  $region32: #{_actor_forward_pallas.1} parent=0 // pred_region
    _
  $region33: #{_actor_forward_pallas.1} parent=0 // pred_fallthru
    _
  // Predicated region
  $region34: #{_actor_forward_pallas.1} parent=0 // pred_check
    _
  $region35: #{_actor_forward_pallas.1} parent=0 // pred_check_branch
    %328 = sbr.rel (0) target = $region37
  $region36: #{_actor_forward_pallas.1} parent=0 // pred_region
    _
  $region37: #{_actor_forward_pallas.1} parent=0 // pred_fallthru
    _

</llo_original>
